<compile_context>
chip_gen: v7x
topology: tpu7x:2x2x1
jax: 0.10.0
libtpu: 0.0.40
codegen_flags: <defaults>
</compile_context>

<pallas_src>
import functools

import jax
import jax.numpy as jnp
from jax.experimental import pallas as pl
from jax.experimental.pallas import tpu as pltpu


def _channel_attention_kernel(x_ref, w1t_ref, w2t_ref, out_ref,
                              sum_acc, max_acc, *, inv_hw):
    # x_ref:   (Nb, C, HWb) one batch-block / spatial-chunk of the input
    # w1t_ref: (C, Chid)    fc1 weight, transposed
    # w2t_ref: (Chid, C)    fc2 weight, transposed
    # out_ref: (Nb, C)      lane-dense output block (C on lanes)
    # sum_acc, max_acc: (Nb, C) f32 VMEM running pooling accumulators
    k = pl.program_id(1)

    @pl.when(k == 0)
    def _init():
        sum_acc[...] = jnp.zeros(sum_acc.shape, dtype=sum_acc.dtype)
        max_acc[...] = jnp.full(max_acc.shape, -jnp.inf, dtype=max_acc.dtype)

    x = x_ref[...]                                            # (Nb, C, HWb)
    sum_acc[...] += jnp.sum(x, axis=-1)                       # (Nb, C)
    max_acc[...] = jnp.maximum(max_acc[...], jnp.max(x, axis=-1))

    @pl.when(k == pl.num_programs(1) - 1)
    def _finalize():
        nb = out_ref.shape[0]
        avg = sum_acc[...] * inv_hw                           # (Nb, C)
        # Stack avg- and max-pooled rows so both branches share one MLP pass.
        pooled = jnp.concatenate([avg, max_acc[...]], axis=0)  # (2Nb, C)
        h = jnp.dot(pooled, w1t_ref[...],
                    preferred_element_type=jnp.float32)        # (2Nb, Chid)
        h = jnp.maximum(h, 0.0)                                # ReLU
        o = jnp.dot(h, w2t_ref[...],
                    preferred_element_type=jnp.float32)        # (2Nb, C)
        out_ref[...] = jax.nn.sigmoid(o[:nb] + o[nb:]).astype(out_ref.dtype)


def _choose_blocks(N, C, HW, budget_bytes):
    """Pick (nb, hwb) block sizes for x blocks of shape (nb, C, hwb).

    nb is the full batch when N <= 8 (block dim == array dim) or a multiple
    of 8 (sublane-aligned (nb, C) output blocks).  hwb divides HW and is a
    multiple of 128 whenever HW is tiled (lane alignment / (8,128) rule).
    budget_bytes bounds the double-buffered f32 x block.
    """
    def x_bytes(nb, hwb):
        return nb * C * hwb * 4 * 2  # f32, double-buffered

    nb = N if N <= 8 else 8
    if x_bytes(nb, HW) <= budget_bytes:
        return nb, HW

    # Need spatial tiling: largest multiple-of-128 divisor of HW that fits.
    cap = max(1, budget_bytes // (nb * C * 4 * 2))
    hwb = 0
    d = 128
    while d <= min(cap, HW):
        if HW % d == 0:
            hwb = d
        d += 128
    if hwb == 0:
        # No 128-multiple divisor of HW fits the soft budget; fall back to a
        # single full-HW block (keeps BlockSpec lane constraints satisfied).
        return nb, HW
    return nb, hwb


def channel_attention(x, w1, w2, *, x_vmem_budget_bytes=16 * 1024 * 1024):
    """x: (N, C, H, W); w1: (C//16, C); w2: (C, C//16) -> (N, C, 1, 1)."""
    N, C, H, W = x.shape
    HW = H * W
    Chid = w1.shape[0]

    x_flat = x.astype(jnp.float32).reshape(N, C, HW)
    w1t = jnp.asarray(w1, jnp.float32).T  # (C, Chid)
    w2t = jnp.asarray(w2, jnp.float32).T  # (Chid, C)

    nb, hwb = _choose_blocks(N, C, HW, x_vmem_budget_bytes)
    grid = (pl.cdiv(N, nb), pl.cdiv(HW, hwb))

    cost = pl.CostEstimate(
        flops=2 * N * C * HW + 8 * N * C * Chid,
        transcendentals=N * C,
        bytes_accessed=4 * (N * C * HW + 2 * C * Chid + N * C),
    )

    out = pl.pallas_call(
        functools.partial(_channel_attention_kernel, inv_hw=1.0 / HW),
        out_shape=jax.ShapeDtypeStruct((N, C), jnp.float32),
        grid_spec=pltpu.PrefetchScalarGridSpec(
            num_scalar_prefetch=0,
            grid=grid,
            in_specs=[
                pl.BlockSpec((nb, C, hwb), lambda n, k: (n, 0, k)),
                pl.BlockSpec((C, Chid), lambda n, k: (0, 0)),   # resident
                pl.BlockSpec((Chid, C), lambda n, k: (0, 0)),   # resident
            ],
            out_specs=pl.BlockSpec((nb, C), lambda n, k: (n, 0)),
            scratch_shapes=[
                pltpu.VMEM((nb, C), jnp.float32),  # running sum
                pltpu.VMEM((nb, C), jnp.float32),  # running max
            ],
        ),
        compiler_params=pltpu.CompilerParams(
            dimension_semantics=("parallel", "arbitrary"),
            vmem_limit_bytes=32 * 1024 * 1024,
        ),
        cost_estimate=cost,
    )(x_flat, w1t, w2t)
    return out.reshape(N, C, 1, 1)


def channel_attention_ref(x, w1, w2):
    """Pure-JAX reference matching the PyTorch forward exactly."""
    avg = jnp.mean(x, axis=(2, 3))  # (N, C)
    mx = jnp.max(x, axis=(2, 3))    # (N, C)

    def mlp(v):  # (N, C)
        h = jnp.maximum(v @ w1.T, 0.0)  # (N, Chid)
        return h @ w2.T                 # (N, C)

    out = jax.nn.sigmoid(mlp(avg) + mlp(mx))
    return out[:, :, None, None]


if __name__ == "__main__":
    key = jax.random.PRNGKey(0)
    kx, k1, k2, kx2, k3, k4 = jax.random.split(key, 6)

    # Case 1: single-block path (whole batch + whole spatial extent per step).
    N, C, H, W = 2, 64, 8, 8
    Chid = C // 16
    x = jax.random.normal(kx, (N, C, H, W), dtype=jnp.float32)
    w1 = jax.random.normal(k1, (Chid, C), dtype=jnp.float32) / jnp.sqrt(C * 1.0)
    w2 = jax.random.normal(k2, (C, Chid), dtype=jnp.float32) / jnp.sqrt(Chid * 1.0)

    out = jax.block_until_ready(channel_attention(x, w1, w2))
    ref = channel_attention_ref(x, w1, w2)
    assert out.shape == (N, C, 1, 1), out.shape
    assert jnp.allclose(out, ref, atol=1e-5, rtol=1e-5), "mismatch vs reference (case 1)"

    # Case 2: force the tiled path (batch blocks of 8, 128-wide spatial tiles,
    # partial edge batch block) via a tiny soft VMEM budget.
    N2, C2, H2, W2 = 10, 32, 16, 16
    Chid2 = C2 // 16
    x2 = jax.random.normal(kx2, (N2, C2, H2, W2), dtype=jnp.float32)
    w1b = jax.random.normal(k3, (Chid2, C2), dtype=jnp.float32) / jnp.sqrt(C2 * 1.0)
    w2b = jax.random.normal(k4, (C2, Chid2), dtype=jnp.float32) / jnp.sqrt(Chid2 * 1.0)

    out2 = jax.block_until_ready(
        channel_attention(x2, w1b, w2b, x_vmem_budget_bytes=256 * 1024))
    ref2 = channel_attention_ref(x2, w1b, w2b)
    assert out2.shape == (N2, C2, 1, 1), out2.shape
    assert jnp.allclose(out2, ref2, atol=1e-5, rtol=1e-5), "mismatch vs reference (case 2)"

    print("KERNEL_OK")
</pallas_src>

<mosaic_0001>
module attributes {stable_mosaic.version = 11 : i64} {
  func.func @_channel_attention_kernel(%arg0: i32, %arg1: i32, %arg2: memref<2x64x64xf32, #tpu.memory_space<vmem>>, %arg3: memref<64x4xf32, #tpu.memory_space<vmem>>, %arg4: memref<4x64xf32, #tpu.memory_space<vmem>>, %arg5: memref<2x64xf32, #tpu.memory_space<vmem>>, %arg6: memref<2x64xf32, #tpu.memory_space<vmem>>, %arg7: memref<2x64xf32, #tpu.memory_space<vmem>>) attributes {dimension_semantics = [#tpu.dimension_semantics<parallel>, #tpu.dimension_semantics<arbitrary>], iteration_bounds = array<i64: 1, 1>, scalar_prefetch = 0 : i64, scratch_operands = 2 : i64, tpu.core_type = #tpu.core_type<tc>, window_params = [{transform_indices = @transform_0, window_bounds = array<i64: 2, 64, 64>}, {pipeline_mode = #tpu.pipeline_mode<synchronous>, transform_indices = @transform_1, window_bounds = array<i64: 64, 4>}, {pipeline_mode = #tpu.pipeline_mode<synchronous>, transform_indices = @transform_2, window_bounds = array<i64: 4, 64>}, {transform_indices = @transform_3, window_bounds = array<i64: 2, 64>}]} {
    %c0_i32 = arith.constant 0 : i32
    %0 = arith.cmpi eq, %arg1, %c0_i32 : i32
    %1 = arith.extui %0 : i1 to i32
    %c0_i32_0 = arith.constant 0 : i32
    %2 = arith.cmpi ne, %1, %c0_i32_0 : i32
    scf.if %2 {
      %cst_14 = arith.constant 0.000000e+00 : f32
      %15 = vector.broadcast %cst_14 : f32 to vector<2x64xf32>
      %c0_15 = arith.constant 0 : index
      %c0_16 = arith.constant 0 : index
      %16 = vector.load %arg6[%c0_15, %c0_16] : memref<2x64xf32, #tpu.memory_space<vmem>>, vector<2x64xf32>
      tpu.vector_store %arg6[%c0_15, %c0_16], %15 {strides = array<i32>} : memref<2x64xf32, #tpu.memory_space<vmem>>, vector<2x64xf32>,
      %cst_17 = arith.constant 0xFF800000 : f32
      %17 = vector.broadcast %cst_17 : f32 to vector<2x64xf32>
      %c0_18 = arith.constant 0 : index
      %c0_19 = arith.constant 0 : index
      %18 = vector.load %arg7[%c0_18, %c0_19] : memref<2x64xf32, #tpu.memory_space<vmem>>, vector<2x64xf32>
      tpu.vector_store %arg7[%c0_18, %c0_19], %17 {strides = array<i32>} : memref<2x64xf32, #tpu.memory_space<vmem>>, vector<2x64xf32>,
    } else {
    }
    %c0 = arith.constant 0 : index
    %c0_1 = arith.constant 0 : index
    %c0_2 = arith.constant 0 : index
    %3 = vector.load %arg2[%c0, %c0_1, %c0_2] : memref<2x64x64xf32, #tpu.memory_space<vmem>>, vector<2x64x64xf32>
    %c0_3 = arith.constant 0 : index
    %c0_4 = arith.constant 0 : index
    %4 = vector.load %arg6[%c0_3, %c0_4] : memref<2x64xf32, #tpu.memory_space<vmem>>, vector<2x64xf32>
    %cst = arith.constant dense<0.000000e+00> : vector<2x64xf32>
    %5 = vector.multi_reduction <add>, %3, %cst [2] : vector<2x64x64xf32> to vector<2x64xf32>
    %6 = arith.addf %4, %5 : vector<2x64xf32>
    %c0_5 = arith.constant 0 : index
    %c0_6 = arith.constant 0 : index
    %7 = vector.load %arg6[%c0_5, %c0_6] : memref<2x64xf32, #tpu.memory_space<vmem>>, vector<2x64xf32>
    tpu.vector_store %arg6[%c0_5, %c0_6], %6 {strides = array<i32>} : memref<2x64xf32, #tpu.memory_space<vmem>>, vector<2x64xf32>,
    %c0_7 = arith.constant 0 : index
    %c0_8 = arith.constant 0 : index
    %8 = vector.load %arg7[%c0_7, %c0_8] : memref<2x64xf32, #tpu.memory_space<vmem>>, vector<2x64xf32>
    %cst_9 = arith.constant dense<0xFF800000> : vector<2x64xf32>
    %9 = vector.multi_reduction <maximumf>, %3, %cst_9 [2] : vector<2x64x64xf32> to vector<2x64xf32>
    %10 = arith.maximumf %8, %9 : vector<2x64xf32>
    %c0_10 = arith.constant 0 : index
    %c0_11 = arith.constant 0 : index
    %11 = vector.load %arg7[%c0_10, %c0_11] : memref<2x64xf32, #tpu.memory_space<vmem>>, vector<2x64xf32>
    tpu.vector_store %arg7[%c0_10, %c0_11], %10 {strides = array<i32>} : memref<2x64xf32, #tpu.memory_space<vmem>>, vector<2x64xf32>,
    %c0_i32_12 = arith.constant 0 : i32
    %12 = arith.cmpi eq, %arg1, %c0_i32_12 : i32
    %13 = arith.extui %12 : i1 to i32
    %c0_i32_13 = arith.constant 0 : i32
    %14 = arith.cmpi ne, %13, %c0_i32_13 : i32
    scf.if %14 {
      %c0_14 = arith.constant 0 : index
      %c0_15 = arith.constant 0 : index
      %15 = vector.load %arg6[%c0_14, %c0_15] : memref<2x64xf32, #tpu.memory_space<vmem>>, vector<2x64xf32>
      %cst_16 = arith.constant 1.562500e-02 : f32
      %16 = vector.broadcast %cst_16 : f32 to vector<2x64xf32>
      %17 = arith.mulf %15, %16 : vector<2x64xf32>
      %c0_17 = arith.constant 0 : index
      %c0_18 = arith.constant 0 : index
      %18 = vector.load %arg7[%c0_17, %c0_18] : memref<2x64xf32, #tpu.memory_space<vmem>>, vector<2x64xf32>
      %19 = tpu.concatenate %17, %18 in 0 : vector<2x64xf32>, vector<2x64xf32> -> vector<4x64xf32>
      %c0_19 = arith.constant 0 : index
      %c0_20 = arith.constant 0 : index
      %20 = vector.load %arg3[%c0_19, %c0_20] : memref<64x4xf32, #tpu.memory_space<vmem>>, vector<64x4xf32>
      %cst_21 = arith.constant dense<0.000000e+00> : vector<4x4xf32>
      %21 = tpu.matmul %19, %20, %cst_21 {dimension_numbers = #tpu.dot_dimension_numbers<[1], [0], [0], [1], [0, 0, 1, 1], [], []>} : vector<4x64xf32>, vector<64x4xf32>, vector<4x4xf32> -> vector<4x4xf32>
      %cst_22 = arith.constant 0.000000e+00 : f32
      %22 = vector.broadcast %cst_22 : f32 to vector<4x4xf32>
      %23 = arith.maximumf %21, %22 : vector<4x4xf32>
      %c0_23 = arith.constant 0 : index
      %c0_24 = arith.constant 0 : index
      %24 = vector.load %arg4[%c0_23, %c0_24] : memref<4x64xf32, #tpu.memory_space<vmem>>, vector<4x64xf32>
      %cst_25 = arith.constant dense<0.000000e+00> : vector<4x64xf32>
      %25 = tpu.matmul %23, %24, %cst_25 {dimension_numbers = #tpu.dot_dimension_numbers<[1], [0], [0], [1], [0, 0, 1, 1], [], []>} : vector<4x4xf32>, vector<4x64xf32>, vector<4x64xf32> -> vector<4x64xf32>
      %26 = vector.extract_strided_slice %25 {offsets = [0, 0], sizes = [2, 64], strides = [1, 1]} : vector<4x64xf32> to vector<2x64xf32>
      %27 = vector.extract_strided_slice %25 {offsets = [2, 0], sizes = [2, 64], strides = [1, 1]} : vector<4x64xf32> to vector<2x64xf32>
      %28 = arith.addf %26, %27 : vector<2x64xf32>
      %29 = arith.negf %28 : vector<2x64xf32>
      %30 = math.exp %29 : vector<2x64xf32>
      %cst_26 = arith.constant 1.000000e+00 : f32
      %31 = vector.broadcast %cst_26 : f32 to vector<2x64xf32>
      %32 = arith.addf %31, %30 : vector<2x64xf32>
      %33 = arith.divf %31, %32 : vector<2x64xf32>
      %c0_27 = arith.constant 0 : index
      %c0_28 = arith.constant 0 : index
      %34 = vector.load %arg5[%c0_27, %c0_28] : memref<2x64xf32, #tpu.memory_space<vmem>>, vector<2x64xf32>
      tpu.vector_store %arg5[%c0_27, %c0_28], %33 {strides = array<i32>} : memref<2x64xf32, #tpu.memory_space<vmem>>, vector<2x64xf32>,
    } else {
    }
    return
  }
  func.func @transform_0(%arg0: i32, %arg1: i32) -> (i32, i32, i32) {
    %c0_i32 = arith.constant 0 : i32
    %c0_i32_0 = arith.constant 0 : i32
    return %arg0, %c0_i32, %arg1 : i32, i32, i32
  }
  func.func @transform_1(%arg0: i32, %arg1: i32) -> (i32, i32) {
    %c0_i32 = arith.constant 0 : i32
    %c0_i32_0 = arith.constant 0 : i32
    %c0_i32_1 = arith.constant 0 : i32
    return %c0_i32, %c0_i32_0 : i32, i32
  }
  func.func @transform_2(%arg0: i32, %arg1: i32) -> (i32, i32) {
    %c0_i32 = arith.constant 0 : i32
    %c0_i32_0 = arith.constant 0 : i32
    %c0_i32_1 = arith.constant 0 : i32
    return %c0_i32, %c0_i32_0 : i32, i32
  }
  func.func @transform_3(%arg0: i32, %arg1: i32) -> (i32, i32) {
    %c0_i32 = arith.constant 0 : i32
    %c0_i32_0 = arith.constant 0 : i32
    return %arg0, %c0_i32 : i32, i32
  }
}

</mosaic_0001>

<llo_original>
// kernel: tpu_custom_call.1
$region0: #{tpu_custom_call.1}
  #allocation0 [shape = 'u32[]', space=smem, size = 0x4, offset = 0x4, fixed_abs, tag = 'smem constant byte address 0x4 - core index']
  #allocation1 [shape = 'u32[144,128]{1,0:T(1,128)}', space=vmem, size = 0x12000, scoped, tag = 'internal scratch']
  #allocation2 [shape = 'f32[2,64]{1,0:T(2,128)}', space=vmem, size = 0x400, scoped, tag = 'scratch operand']
  #allocation3 [shape = 'f32[2,64]{1,0:T(2,128)}', space=vmem, size = 0x400, scoped, tag = 'scratch operand']
  %s0 = inlined_call_operand.hbm [shape: f32[2,64,64], index: 0, kind: input, shape index: {}]
  %s1 = inlined_call_operand.vmem [shape: f32[64,4], index: 1, kind: input, shape index: {}]
  %s2 = inlined_call_operand.vmem [shape: f32[4,64], index: 2, kind: input, shape index: {}]
  %s3 = inlined_call_operand.hbm [shape: f32[2,64], index: 3, kind: output, shape index: {}]
  %s4 = sld [smem:[#allocation0]]
  $region34: #{tpu_custom_call.1} parent=0
    _
  %s6 = ssub.s32 1, %s4
  %s7 = scalar_select 0, %s6, %s4
  $region1: #{tpu_custom_call.1} parent=0
    #allocation4 [shape = 'u8[65536]{0}', space=vmem, size = 0x10000, scoped, tag = 'input window, operand 0, single buffered']
    #allocation5 [shape = 's32[1]{0}', space=sflag, size = 0x4, scoped, tag = 'scoped memory for tpu_custom_call.1']
    #allocation6 [shape = 's32[1]{0}', space=sflag, size = 0x4, scoped, tag = 'scoped memory for tpu_custom_call.1']
    #allocation7 [shape = 'u8[1024]{0}', space=vmem, size = 0x400, scoped, tag = 'output window, operand 0, single buffered']
    %8 = vsyncpa [#allocation5], 0
    %9 = vsyncpa [#allocation6], 0
    // Predicated region
    $region2: #{tpu_custom_call.1} parent=1 // pred_check
      _
    $region3: #{tpu_custom_call.1} parent=1 // pred_check_branch
      %11 = sbr.rel (0) target = $region5
    $region4: #{tpu_custom_call.1} parent=1 // pred_region
      %s13 = ssub.s32 2048, 2048
      %14 = vsyncadd [#allocation5], %s13
      %s15 = sshll.u32 [#allocation4], 4
      %s16 = int_to_ptr.vmem [resolvable:$true] %s15
      %21 = dma.hbm_to_vmem [thread:$0]  %s0, 2048, %s16, [#allocation5], 128, 128, 8
    $region5: #{tpu_custom_call.1} parent=1 // pred_fallthru
      _
    // Predicated region
    $region6: #{tpu_custom_call.1} parent=1 // pred_check
      _
    $region7: #{tpu_custom_call.1} parent=1 // pred_check_branch
      %23 = sbr.rel (0) target = $region9
    $region8: #{tpu_custom_call.1} parent=1 // pred_region
      _
    $region9: #{tpu_custom_call.1} parent=1 // pred_fallthru
      _
    // Predicated region
    $region10: #{tpu_custom_call.1} parent=1 // pred_check
      _
    $region11: #{tpu_custom_call.1} parent=1 // pred_check_branch
      %25 = sbr.rel (0) target = $region13
    $region12: #{tpu_custom_call.1} parent=1 // pred_region
      _
    $region13: #{tpu_custom_call.1} parent=1 // pred_fallthru
      _
    // Predicated region
    $region14: #{tpu_custom_call.1} parent=1 // pred_check
      _
    $region15: #{tpu_custom_call.1} parent=1 // pred_check_branch
      %27 = sbr.rel (0) target = $region17
    $region16: #{tpu_custom_call.1} parent=1 // pred_region
      %28 = dma.done [#allocation5], 2048
    $region17: #{tpu_custom_call.1} parent=1 // pred_fallthru
      _
    %p29 = scmp.eq.s32.totalorder 0, 0
    // Predicated region
    $region18: #{tpu_custom_call.1} parent=1 // pred_check
      %p30 = pneg %p29
    $region19: #{tpu_custom_call.1} parent=1 // pred_check_branch
      %32 = sbr.rel (%p30) target = $region21
    $region20: #{tpu_custom_call.1} parent=1 // pred_region
      %vm33 = vcmask 517120
      %34 = vst.msk [vmem:[#allocation2] sm:$0x3] %vm33, 0.0
      %35 = vst.msk [vmem:[#allocation3] sm:$0x3] %vm33, -inf
    $region21: #{tpu_custom_call.1} parent=1 // pred_fallthru
      _
    %v36 = vld [vmem:[#allocation4] sm:$0xff]
    %v37 = vld [vmem:[#allocation4 + $0x8] sm:$0xff]
    %v38 = vld [vmem:[#allocation4 + $0x10] sm:$0xff]
    %v39 = vld [vmem:[#allocation4 + $0x18] sm:$0xff]
    %v40 = vld [vmem:[#allocation4 + $0x20] sm:$0xff]
    %v41 = vld [vmem:[#allocation4 + $0x28] sm:$0xff]
    %v42 = vld [vmem:[#allocation4 + $0x30] sm:$0xff]
    %v43 = vld [vmem:[#allocation4 + $0x38] sm:$0xff]
    %v44 = vld [vmem:[#allocation4 + $0x40] sm:$0xff]
    %v45 = vld [vmem:[#allocation4 + $0x48] sm:$0xff]
    %v46 = vld [vmem:[#allocation4 + $0x50] sm:$0xff]
    %v47 = vld [vmem:[#allocation4 + $0x58] sm:$0xff]
    %v48 = vld [vmem:[#allocation4 + $0x60] sm:$0xff]
    %v49 = vld [vmem:[#allocation4 + $0x68] sm:$0xff]
    %v50 = vld [vmem:[#allocation4 + $0x70] sm:$0xff]
    %v51 = vld [vmem:[#allocation4 + $0x78] sm:$0xff]
    %v52 = vld [vmem:[#allocation2] sm:$0x3]
    %vm53 = vcmask 523264
    %v54 = vsel %vm53, %v36, 0.0
    %55 = vadd.xlane.f32.xlu0 %v54
    %v56 = vpop.xlane.xlu0 %55
    %v57 = vsel %vm53, %v37, 0.0
    %58 = vadd.xlane.f32.xlu0 %v57
    %v59 = vpop.xlane.xlu0 %58
    %v60 = vsel %vm53, %v38, 0.0
    %61 = vadd.xlane.f32.xlu0 %v60
    %v62 = vpop.xlane.xlu0 %61
    %v63 = vsel %vm53, %v39, 0.0
    %64 = vadd.xlane.f32.xlu0 %v63
    %v65 = vpop.xlane.xlu0 %64
    %v66 = vsel %vm53, %v40, 0.0
    %67 = vadd.xlane.f32.xlu0 %v66
    %v68 = vpop.xlane.xlu0 %67
    %v69 = vsel %vm53, %v41, 0.0
    %70 = vadd.xlane.f32.xlu0 %v69
    %v71 = vpop.xlane.xlu0 %70
    %v72 = vsel %vm53, %v42, 0.0
    %73 = vadd.xlane.f32.xlu0 %v72
    %v74 = vpop.xlane.xlu0 %73
    %v75 = vsel %vm53, %v43, 0.0
    %76 = vadd.xlane.f32.xlu0 %v75
    %v77 = vpop.xlane.xlu0 %76
    %v78 = vsel %vm53, %v44, 0.0
    %79 = vadd.xlane.f32.xlu0 %v78
    %v80 = vpop.xlane.xlu0 %79
    %v81 = vsel %vm53, %v45, 0.0
    %82 = vadd.xlane.f32.xlu0 %v81
    %v83 = vpop.xlane.xlu0 %82
    %v84 = vsel %vm53, %v46, 0.0
    %85 = vadd.xlane.f32.xlu0 %v84
    %v86 = vpop.xlane.xlu0 %85
    %v87 = vsel %vm53, %v47, 0.0
    %88 = vadd.xlane.f32.xlu0 %v87
    %v89 = vpop.xlane.xlu0 %88
    %v90 = vsel %vm53, %v48, 0.0
    %91 = vadd.xlane.f32.xlu0 %v90
    %v92 = vpop.xlane.xlu0 %91
    %v93 = vsel %vm53, %v49, 0.0
    %94 = vadd.xlane.f32.xlu0 %v93
    %v95 = vpop.xlane.xlu0 %94
    %v96 = vsel %vm53, %v50, 0.0
    %97 = vadd.xlane.f32.xlu0 %v96
    %v98 = vpop.xlane.xlu0 %97
    %v99 = vsel %vm53, %v51, 0.0
    %100 = vadd.xlane.f32.xlu0 %v99
    %v101 = vpop.xlane.xlu0 %100
    %v118 = vlaneseq
    %v119 = vand.u32 %v118, 127
    %v120 = vlaneseq
    %v121 = vshrl.u32 %v120, 7
    %v122 = vsub.s32 %v119, %v121
    %v123 = vrot.slane %v56, %v122
    %v124 = vadd.s32 %v119, 4294967288
    %v125 = vlaneseq
    %v126 = vshrl.u32 %v125, 7
    %v127 = vsub.s32 %v124, %v126
    %v128 = vrot.slane %v59, %v127
    %vm129 = vcmask 130112
    %v130 = vsel %vm129, %v128, %v123
    %v131 = vadd.s32 %v119, 4294967280
    %v132 = vlaneseq
    %v133 = vshrl.u32 %v132, 7
    %v134 = vsub.s32 %v131, %v133
    %v135 = vrot.slane %v62, %v134
    %vm136 = vcmask 195712
    %v137 = vsel %vm136, %v135, %v130
    %v138 = vadd.s32 %v119, 4294967272
    %v139 = vlaneseq
    %v140 = vshrl.u32 %v139, 7
    %v141 = vsub.s32 %v138, %v140
    %v142 = vrot.slane %v65, %v141
    %vm143 = vcmask 261312
    %v144 = vsel %vm143, %v142, %v137
    %v145 = vadd.s32 %v119, 4294967264
    %v146 = vlaneseq
    %v147 = vshrl.u32 %v146, 7
    %v148 = vsub.s32 %v145, %v147
    %v149 = vrot.slane %v68, %v148
    %vm150 = vcmask 326912
    %v151 = vsel %vm150, %v149, %v144
    %v152 = vadd.s32 %v119, 4294967256
    %v153 = vlaneseq
    %v154 = vshrl.u32 %v153, 7
    %v155 = vsub.s32 %v152, %v154
    %v156 = vrot.slane %v71, %v155
    %vm157 = vcmask 392512
    %v158 = vsel %vm157, %v156, %v151
    %v159 = vadd.s32 %v119, 4294967248
    %v160 = vlaneseq
    %v161 = vshrl.u32 %v160, 7
    %v162 = vsub.s32 %v159, %v161
    %v163 = vrot.slane %v74, %v162
    %vm164 = vcmask 458112
    %v165 = vsel %vm164, %v163, %v158
    %v166 = vadd.s32 %v119, 4294967240
    %v167 = vlaneseq
    %v168 = vshrl.u32 %v167, 7
    %v169 = vsub.s32 %v166, %v168
    %v170 = vrot.slane %v77, %v169
    %vm171 = vcmask 523712
    %v172 = vsel %vm171, %v170, %v165
    %v173 = vlaneseq
    %v174 = vshrl.u32 %v173, 7
    %v175 = vsub.s32 %v119, %v174
    %v176 = vrot.slane %v80, %v175
    %v177 = vlaneseq
    %v178 = vshrl.u32 %v177, 7
    %v179 = vsub.s32 %v124, %v178
    %v180 = vrot.slane %v83, %v179
    %v181 = vsel %vm129, %v180, %v176
    %v182 = vlaneseq
    %v183 = vshrl.u32 %v182, 7
    %v184 = vsub.s32 %v131, %v183
    %v185 = vrot.slane %v86, %v184
    %v186 = vsel %vm136, %v185, %v181
    %v187 = vlaneseq
    %v188 = vshrl.u32 %v187, 7
    %v189 = vsub.s32 %v138, %v188
    %v190 = vrot.slane %v89, %v189
    %v191 = vsel %vm143, %v190, %v186
    %v192 = vlaneseq
    %v193 = vshrl.u32 %v192, 7
    %v194 = vsub.s32 %v145, %v193
    %v195 = vrot.slane %v92, %v194
    %v196 = vsel %vm150, %v195, %v191
    %v197 = vlaneseq
    %v198 = vshrl.u32 %v197, 7
    %v199 = vsub.s32 %v152, %v198
    %v200 = vrot.slane %v95, %v199
    %v201 = vsel %vm157, %v200, %v196
    %v202 = vlaneseq
    %v203 = vshrl.u32 %v202, 7
    %v204 = vsub.s32 %v159, %v203
    %v205 = vrot.slane %v98, %v204
    %v206 = vsel %vm164, %v205, %v201
    %v207 = vlaneseq
    %v208 = vshrl.u32 %v207, 7
    %v209 = vsub.s32 %v166, %v208
    %v210 = vrot.slane %v101, %v209
    %v211 = vsel %vm171, %v210, %v206
    %vm212 = vcmask 1041409
    %v213 = vsel %vm212, %v211, %v172
    %v215 = vadd.f32 %v52, %v213
    %vm216 = vcmask 517120
    %217 = vst.msk [vmem:[#allocation2] sm:$0x3] %vm216, %v215
    %v218 = vld [vmem:[#allocation3] sm:$0x3]
    %v219 = vsel %vm53, %v36, -inf
    %220 = vmax.xlane.f32.xlu0 %v219
    %v221 = vpop.xlane.xlu0 %220
    %v222 = vsel %vm53, %v37, -inf
    %223 = vmax.xlane.f32.xlu0 %v222
    %v224 = vpop.xlane.xlu0 %223
    %v225 = vsel %vm53, %v38, -inf
    %226 = vmax.xlane.f32.xlu0 %v225
    %v227 = vpop.xlane.xlu0 %226
    %v228 = vsel %vm53, %v39, -inf
    %229 = vmax.xlane.f32.xlu0 %v228
    %v230 = vpop.xlane.xlu0 %229
    %v231 = vsel %vm53, %v40, -inf
    %232 = vmax.xlane.f32.xlu0 %v231
    %v233 = vpop.xlane.xlu0 %232
    %v234 = vsel %vm53, %v41, -inf
    %235 = vmax.xlane.f32.xlu0 %v234
    %v236 = vpop.xlane.xlu0 %235
    %v237 = vsel %vm53, %v42, -inf
    %238 = vmax.xlane.f32.xlu0 %v237
    %v239 = vpop.xlane.xlu0 %238
    %v240 = vsel %vm53, %v43, -inf
    %241 = vmax.xlane.f32.xlu0 %v240
    %v242 = vpop.xlane.xlu0 %241
    %v243 = vsel %vm53, %v44, -inf
    %244 = vmax.xlane.f32.xlu0 %v243
    %v245 = vpop.xlane.xlu0 %244
    %v246 = vsel %vm53, %v45, -inf
    %247 = vmax.xlane.f32.xlu0 %v246
    %v248 = vpop.xlane.xlu0 %247
    %v249 = vsel %vm53, %v46, -inf
    %250 = vmax.xlane.f32.xlu0 %v249
    %v251 = vpop.xlane.xlu0 %250
    %v252 = vsel %vm53, %v47, -inf
    %253 = vmax.xlane.f32.xlu0 %v252
    %v254 = vpop.xlane.xlu0 %253
    %v255 = vsel %vm53, %v48, -inf
    %256 = vmax.xlane.f32.xlu0 %v255
    %v257 = vpop.xlane.xlu0 %256
    %v258 = vsel %vm53, %v49, -inf
    %259 = vmax.xlane.f32.xlu0 %v258
    %v260 = vpop.xlane.xlu0 %259
    %v261 = vsel %vm53, %v50, -inf
    %262 = vmax.xlane.f32.xlu0 %v261
    %v263 = vpop.xlane.xlu0 %262
    %v264 = vsel %vm53, %v51, -inf
    %265 = vmax.xlane.f32.xlu0 %v264
    %v266 = vpop.xlane.xlu0 %265
    %v283 = vlaneseq
    %v284 = vshrl.u32 %v283, 7
    %v285 = vsub.s32 %v119, %v284
    %v286 = vrot.slane %v221, %v285
    %v287 = vlaneseq
    %v288 = vshrl.u32 %v287, 7
    %v289 = vsub.s32 %v124, %v288
    %v290 = vrot.slane %v224, %v289
    %v291 = vsel %vm129, %v290, %v286
    %v292 = vlaneseq
    %v293 = vshrl.u32 %v292, 7
    %v294 = vsub.s32 %v131, %v293
    %v295 = vrot.slane %v227, %v294
    %v296 = vsel %vm136, %v295, %v291
    %v297 = vlaneseq
    %v298 = vshrl.u32 %v297, 7
    %v299 = vsub.s32 %v138, %v298
    %v300 = vrot.slane %v230, %v299
    %v301 = vsel %vm143, %v300, %v296
    %v302 = vlaneseq
    %v303 = vshrl.u32 %v302, 7
    %v304 = vsub.s32 %v145, %v303
    %v305 = vrot.slane %v233, %v304
    %v306 = vsel %vm150, %v305, %v301
    %v307 = vlaneseq
    %v308 = vshrl.u32 %v307, 7
    %v309 = vsub.s32 %v152, %v308
    %v310 = vrot.slane %v236, %v309
    %v311 = vsel %vm157, %v310, %v306
    %v312 = vlaneseq
    %v313 = vshrl.u32 %v312, 7
    %v314 = vsub.s32 %v159, %v313
    %v315 = vrot.slane %v239, %v314
    %v316 = vsel %vm164, %v315, %v311
    %v317 = vlaneseq
    %v318 = vshrl.u32 %v317, 7
    %v319 = vsub.s32 %v166, %v318
    %v320 = vrot.slane %v242, %v319
    %v321 = vsel %vm171, %v320, %v316
    %v322 = vlaneseq
    %v323 = vshrl.u32 %v322, 7
    %v324 = vsub.s32 %v119, %v323
    %v325 = vrot.slane %v245, %v324
    %v326 = vlaneseq
    %v327 = vshrl.u32 %v326, 7
    %v328 = vsub.s32 %v124, %v327
    %v329 = vrot.slane %v248, %v328
    %v330 = vsel %vm129, %v329, %v325
    %v331 = vlaneseq
    %v332 = vshrl.u32 %v331, 7
    %v333 = vsub.s32 %v131, %v332
    %v334 = vrot.slane %v251, %v333
    %v335 = vsel %vm136, %v334, %v330
    %v336 = vlaneseq
    %v337 = vshrl.u32 %v336, 7
    %v338 = vsub.s32 %v138, %v337
    %v339 = vrot.slane %v254, %v338
    %v340 = vsel %vm143, %v339, %v335
    %v341 = vlaneseq
    %v342 = vshrl.u32 %v341, 7
    %v343 = vsub.s32 %v145, %v342
    %v344 = vrot.slane %v257, %v343
    %v345 = vsel %vm150, %v344, %v340
    %v346 = vlaneseq
    %v347 = vshrl.u32 %v346, 7
    %v348 = vsub.s32 %v152, %v347
    %v349 = vrot.slane %v260, %v348
    %v350 = vsel %vm157, %v349, %v345
    %v351 = vlaneseq
    %v352 = vshrl.u32 %v351, 7
    %v353 = vsub.s32 %v159, %v352
    %v354 = vrot.slane %v263, %v353
    %v355 = vsel %vm164, %v354, %v350
    %v356 = vlaneseq
    %v357 = vshrl.u32 %v356, 7
    %v358 = vsub.s32 %v166, %v357
    %v359 = vrot.slane %v266, %v358
    %v360 = vsel %vm171, %v359, %v355
    %v361 = vsel %vm212, %v360, %v321
    %v363 = vmax.f32 %v218, %v361
    %364 = vst.msk [vmem:[#allocation3] sm:$0x3] %vm216, %v363
    // Predicated region
    $region22: #{tpu_custom_call.1} parent=1 // pred_check
      %p365 = pneg %p29
    $region23: #{tpu_custom_call.1} parent=1 // pred_check_branch
      %367 = sbr.rel (%p365) target = $region25
    $region24: #{tpu_custom_call.1} parent=1 // pred_region
      %v368 = vld [vmem:[#allocation2] sm:$0x3]
      %v369 = vmul.f32 %v368, 0.015625
      %v370 = vld [vmem:[#allocation3] sm:$0x3]
      %v372 = vrot.slane %v370, 6
      %vm374 = vcmask 1041408
      %v375 = vsel %vm374, %v369, %v372
      %v376 = vld [vmem:[%s1] sm:$0xff]
      %v377 = vld [vmem:[%s1 + $0x8] sm:$0xff]
      %v378 = vld [vmem:[%s1 + $0x10] sm:$0xff]
      %v379 = vld [vmem:[%s1 + $0x18] sm:$0xff]
      %v380 = vld [vmem:[%s1 + $0x20] sm:$0xff]
      %v381 = vld [vmem:[%s1 + $0x28] sm:$0xff]
      %v382 = vld [vmem:[%s1 + $0x30] sm:$0xff]
      %v383 = vld [vmem:[%s1 + $0x38] sm:$0xff]
      %v385 = vsel %vm53, %v375, 0
      %387 = vmatprep.subr.mxu0 0.0
      %388 = vmatpush1.msra.mxu0 %v376
      %389 = vmatprep.subr.mxu0 0.0
      %390 = vmatpush1.msra.mxu0 %v377
      %391 = vmatprep.subr.mxu0 0.0
      %392 = vmatpush1.msra.mxu0 %v378
      %393 = vmatprep.subr.mxu0 0.0
      %394 = vmatpush1.msra.mxu0 %v379
      %395 = vmatprep.subr.mxu0 0.0
      %396 = vmatpush1.msra.mxu0 %v380
      %397 = vmatprep.subr.mxu0 0.0
      %398 = vmatpush1.msra.mxu0 %v381
      %399 = vmatprep.subr.mxu0 0.0
      %400 = vmatpush1.msra.mxu0 %v382
      %401 = vmatprep.subr.mxu0 0.0
      %402 = vmatpush1.msra.mxu0 %v383
      %403 = vmatprep.subr.mxu0 0.0
      %404 = vmatpush1.msra.mxu0 0.0
      %405 = vmatprep.subr.mxu0 0.0
      %406 = vmatpush1.msra.mxu0 0.0
      %407 = vmatprep.subr.mxu0 0.0
      %408 = vmatpush1.msra.mxu0 0.0
      %409 = vmatprep.subr.mxu0 0.0
      %410 = vmatpush1.msra.mxu0 0.0
      %411 = vmatprep.subr.mxu0 0.0
      %412 = vmatpush1.msra.mxu0 0.0
      %413 = vmatprep.subr.mxu0 0.0
      %414 = vmatpush1.msra.mxu0 0.0
      %415 = vmatprep.subr.mxu0 0.0
      %416 = vmatpush1.msra.mxu0 0.0
      %417 = vmatprep.subr.mxu0 0.0
      %418 = vmatpush1.msra.mxu0 0.0
      %419 = vmatprep.subr.mxu0 0.0
      %420 = vmatpush1.msra.mxu0 0.0
      %421 = vmatprep.subr.mxu0 0.0
      %422 = vmatpush1.msra.mxu0 0.0
      %423 = vmatprep.subr.mxu0 0.0
      %424 = vmatpush1.msra.mxu0 0.0
      %425 = vmatprep.subr.mxu0 0.0
      %426 = vmatpush1.msra.mxu0 0.0
      %427 = vmatprep.subr.mxu0 0.0
      %428 = vmatpush1.msra.mxu0 0.0
      %429 = vmatprep.subr.mxu0 0.0
      %430 = vmatpush1.msra.mxu0 0.0
      %431 = vmatprep.subr.mxu0 0.0
      %432 = vmatpush1.msra.mxu0 0.0
      %433 = vmatprep.subr.mxu0 0.0
      %434 = vmatpush1.msra.mxu0 0.0
      %435 = vmatprep.subr.mxu0 0.0
      %436 = vmatpush1.msra.mxu0 0.0
      %437 = vmatprep.subr.mxu0 0.0
      %438 = vmatpush1.msra.mxu0 0.0
      %439 = vmatprep.subr.mxu0 0.0
      %440 = vmatpush1.msra.mxu0 0.0
      %441 = vmatprep.subr.mxu0 0.0
      %442 = vmatpush1.msra.mxu0 0.0
      %443 = vmatprep.subr.mxu0 0.0
      %444 = vmatpush1.msra.mxu0 0.0
      %445 = vmatprep.subr.mxu0 0.0
      %446 = vmatpush1.msra.mxu0 0.0
      %447 = vmatprep.subr.mxu0 0.0
      %448 = vmatpush1.msra.mxu0 0.0
      %449 = vmatprep.subr.mxu0 0.0
      %450 = vmatpush1.msra.mxu0 0.0
      %451 = vmatprep.mubr.f32.mxu0 0.0
      %452 = vmatmul.mubr.f32.gmra.mrb[0].mxu0 %v385
      %v453 = vpop.f32.mrb[0].mxu0
      %v454 = vadd.f32 0.0, %v453
      %v455 = vpop.f32.mrb[0].mxu0
      %456 = vdwg.mxu0
      %v457 = vmax.f32 %v454, 0.0
      %v458 = vld [vmem:[%s2] sm:$0xf]
      %vm459 = vcmask 31744
      %v461 = vsel %vm459, %v457, 0
      %vm463 = vcmask 1043456
      %v465 = vsel %vm463, %v458, 0
      %467 = vmatprep.subr.mxu0 0.0
      %468 = vmatpush1.msra.mxu0 %v465
      %469 = vmatprep.subr.mxu0 0.0
      %470 = vmatpush1.msra.mxu0 0.0
      %471 = vmatprep.subr.mxu0 0.0
      %472 = vmatpush1.msra.mxu0 0.0
      %473 = vmatprep.subr.mxu0 0.0
      %474 = vmatpush1.msra.mxu0 0.0
      %475 = vmatprep.subr.mxu0 0.0
      %476 = vmatpush1.msra.mxu0 0.0
      %477 = vmatprep.subr.mxu0 0.0
      %478 = vmatpush1.msra.mxu0 0.0
      %479 = vmatprep.subr.mxu0 0.0
      %480 = vmatpush1.msra.mxu0 0.0
      %481 = vmatprep.subr.mxu0 0.0
      %482 = vmatpush1.msra.mxu0 0.0
      %483 = vmatprep.subr.mxu0 0.0
      %484 = vmatpush1.msra.mxu0 0.0
      %485 = vmatprep.subr.mxu0 0.0
      %486 = vmatpush1.msra.mxu0 0.0
      %487 = vmatprep.subr.mxu0 0.0
      %488 = vmatpush1.msra.mxu0 0.0
      %489 = vmatprep.subr.mxu0 0.0
      %490 = vmatpush1.msra.mxu0 0.0
      %491 = vmatprep.subr.mxu0 0.0
      %492 = vmatpush1.msra.mxu0 0.0
      %493 = vmatprep.subr.mxu0 0.0
      %494 = vmatpush1.msra.mxu0 0.0
      %495 = vmatprep.subr.mxu0 0.0
      %496 = vmatpush1.msra.mxu0 0.0
      %497 = vmatprep.subr.mxu0 0.0
      %498 = vmatpush1.msra.mxu0 0.0
      %499 = vmatprep.subr.mxu0 0.0
      %500 = vmatpush1.msra.mxu0 0.0
      %501 = vmatprep.subr.mxu0 0.0
      %502 = vmatpush1.msra.mxu0 0.0
      %503 = vmatprep.subr.mxu0 0.0
      %504 = vmatpush1.msra.mxu0 0.0
      %505 = vmatprep.subr.mxu0 0.0
      %506 = vmatpush1.msra.mxu0 0.0
      %507 = vmatprep.subr.mxu0 0.0
      %508 = vmatpush1.msra.mxu0 0.0
      %509 = vmatprep.subr.mxu0 0.0
      %510 = vmatpush1.msra.mxu0 0.0
      %511 = vmatprep.subr.mxu0 0.0
      %512 = vmatpush1.msra.mxu0 0.0
      %513 = vmatprep.subr.mxu0 0.0
      %514 = vmatpush1.msra.mxu0 0.0
      %515 = vmatprep.subr.mxu0 0.0
      %516 = vmatpush1.msra.mxu0 0.0
      %517 = vmatprep.subr.mxu0 0.0
      %518 = vmatpush1.msra.mxu0 0.0
      %519 = vmatprep.subr.mxu0 0.0
      %520 = vmatpush1.msra.mxu0 0.0
      %521 = vmatprep.subr.mxu0 0.0
      %522 = vmatpush1.msra.mxu0 0.0
      %523 = vmatprep.subr.mxu0 0.0
      %524 = vmatpush1.msra.mxu0 0.0
      %525 = vmatprep.subr.mxu0 0.0
      %526 = vmatpush1.msra.mxu0 0.0
      %527 = vmatprep.subr.mxu0 0.0
      %528 = vmatpush1.msra.mxu0 0.0
      %529 = vmatprep.subr.mxu0 0.0
      %530 = vmatpush1.msra.mxu0 0.0
      %531 = vmatprep.mubr.f32.mxu0 0.0
      %532 = vmatmul.mubr.f32.gmra.mrb[0].mxu0 %v461
      %v533 = vpop.f32.mrb[0].mxu0
      %v534 = vadd.f32 0.0, %v533
      %v535 = vpop.f32.mrb[0].mxu0
      %536 = vdwg.mxu0
      %v538 = vrot.slane %v534, 2
      %v540 = vadd.f32 %v534, %v538
      %v541 = vxor.u32 %v540, 2147483648
      %v542 = vmul.f32 %v541, 1.442695
      %v543 = vpow.pop %v542
      %v544 = vadd.f32 %v543, 1.0
      %v545 = vrcp.pop %v544
      %v546 = vmul.f32 1.0, %v545
      %547 = vst.msk [vmem:[#allocation7] sm:$0x3] %vm216, %v546
    $region25: #{tpu_custom_call.1} parent=1 // pred_fallthru
      _
    // Predicated region
    $region26: #{tpu_custom_call.1} parent=1 // pred_check
      _
    $region27: #{tpu_custom_call.1} parent=1 // pred_check_branch
      %549 = sbr.rel (0) target = $region29
    $region28: #{tpu_custom_call.1} parent=1 // pred_region
      %s551 = ssub.s32 32, 32
      %552 = vsyncadd [#allocation6], %s551
      %s554 = sshll.u32 [#allocation7], 4
      %s555 = int_to_ptr.vmem [resolvable:$true] %s554
      %557 = dma.vmem_to_hbm [thread:$0]  %s555, 32, %s3, [#allocation6]
    $region29: #{tpu_custom_call.1} parent=1 // pred_fallthru
      _
    // Predicated region
    $region30: #{tpu_custom_call.1} parent=1 // pred_check
      _
    $region31: #{tpu_custom_call.1} parent=1 // pred_check_branch
      %559 = sbr.rel (0) target = $region33
    $region32: #{tpu_custom_call.1} parent=1 // pred_region
      %560 = dma.done [#allocation6], 32
    $region33: #{tpu_custom_call.1} parent=1 // pred_fallthru
      _
    %561 = vsyncpa [#allocation5], 1
    %562 = vsyncpa [#allocation6], 1

</llo_original>
